<compile_context>
chip_gen: v7x
topology: tpu7x:2x2x1
jax: 0.10.0
libtpu: 0.0.40
codegen_flags: <defaults>
</compile_context>

<pallas_src>
import jax
import jax.numpy as jnp
from jax import lax
from jax.experimental import pallas as pl
from jax.experimental.pallas import tpu as pltpu

IGNORE_INDEX = -100

DECODER = "decoder"
SIMILARITY_THRESHOLD = "similarity_threshold"
MULTITASK = "multitask"


def _round_up(x, m):
    return ((x + m - 1) // m) * m


def _vmem_limit_bytes():
    """Per-generation VMEM limit (v5e/v6e: 128 MiB physical, v7x: 64 MiB)."""
    try:
        cap = int(pltpu.get_tpu_info().vmem_capacity_bytes)
    except Exception:
        cap = 64 * 1024 * 1024  # conservative default (v7x size)
    return min((cap * 3) // 4, 96 * 1024 * 1024)


def _pick_row_tile(n, c, itemsize, vmem_limit):
    """Largest dtype-legal row tile whose pipelined footprint fits VMEM."""
    # Minimum second-to-last block dim per dtype: 8 (f32), 16 (bf16), 32 (i8).
    sub = max(8, 32 // max(1, itemsize))
    c_lanes = _round_up(c, 128)  # lane padding of the logits block in VMEM
    # Per-row VMEM bytes: 2 tasks x 2 pipeline buffers x (logits + int32 tgt)
    # plus headroom for ~3 f32 tile temporaries (f32 cast / exp) in the body.
    per_row = 4 * (c_lanes * itemsize + 128 * 4) + 3 * c_lanes * 4
    usable = vmem_limit // 2
    max_rows = max(sub, usable // per_row)
    tr = min(max_rows, _round_up(n, sub))
    tr = max(sub, (tr // sub) * sub)
    # TODO(synk): for vocab-scale C where even tr==sub exceeds the budget, add
    # a second 'arbitrary' grid axis over C with an online logsumexp.
    return tr


# ----------------------------------------------------------------------------
# Fused kernel: per-row-tile CE partial sums for BOTH tasks.
#   grid = (num_cores ["parallel"], tiles_per_core ["arbitrary"])
# Each core accumulates (nll_sum, valid_count) per task into a (2,2) VMEM
# scratch and dumps it to its own output slot on its last row step.
# ----------------------------------------------------------------------------
def _multitask_ce_kernel(dec_logits_ref, dec_tgt_ref,
                         sim_logits_ref, sim_tgt_ref,
                         partials_ref, acc_ref):
    r = pl.program_id(1)
    nr = pl.num_programs(1)

    @pl.when(r == 0)
    def _init():
        acc_ref[...] = jnp.zeros_like(acc_ref)

    row = lax.broadcasted_iota(jnp.int32, (2, 2), 0)  # task index
    col = lax.broadcasted_iota(jnp.int32, (2, 2), 1)  # 0 = nll sum, 1 = count

    def _accumulate(logits_ref, tgt_ref, slot):
        logits = logits_ref[...].astype(jnp.float32)            # (TR, C)
        tgt = tgt_ref[...]                                       # (TR, 1) int32

        # numerically-stable log-sum-exp over the class (lane) axis
        m = jnp.max(logits, axis=-1, keepdims=True)              # (TR, 1)
        lse = jnp.log(jnp.sum(jnp.exp(logits - m), axis=-1,
                              keepdims=True)) + m                # (TR, 1)

        # gather the target logit via one-hot (lane iota compare)
        cls = lax.broadcasted_iota(jnp.int32, logits.shape, 1)   # (TR, C)
        tgt_logit = jnp.sum(jnp.where(cls == tgt, logits, 0.0),
                            axis=-1, keepdims=True)              # (TR, 1)

        nll = lse - tgt_logit
        valid = tgt != IGNORE_INDEX                              # padded rows masked too

        s = jnp.sum(jnp.where(valid, nll, 0.0), keepdims=True)   # (1, 1)
        cnt = jnp.sum(valid.astype(jnp.float32), keepdims=True)  # (1, 1)

        contrib = jnp.where(col == 0,
                            jnp.broadcast_to(s, (2, 2)),
                            jnp.broadcast_to(cnt, (2, 2)))
        contrib = jnp.where(row == slot, contrib, jnp.zeros_like(contrib))
        acc_ref[...] = acc_ref[...] + contrib

    _accumulate(dec_logits_ref, dec_tgt_ref, 0)
    _accumulate(sim_logits_ref, sim_tgt_ref, 1)

    @pl.when(r == nr - 1)
    def _finalize():
        partials_ref[0] = acc_ref[...]                           # (2, 2) per core


def multi_task_loss_all(output, target, log_vars, mml_emp):
    """Returns {DECODER: loss0, SIMILARITY_THRESHOLD: loss1, MULTITASK: mean}."""
    dec_logits = output[DECODER]
    sim_logits = output[SIMILARITY_THRESHOLD]
    dec_tgt = target[DECODER]
    sim_tgt = target[SIMILARITY_THRESHOLD]

    # TODO(synk): tasks with differing (N, C) shapes would need separate grids
    # (or padding); module usage here has matched shapes for both heads.
    assert dec_logits.shape == sim_logits.shape, "task logits shapes must match"
    n, c = dec_logits.shape

    vmem_limit = _vmem_limit_bytes()
    tr = _pick_row_tile(n, c, dec_logits.dtype.itemsize, vmem_limit)

    # Split the row range across TensorCores when there is enough work
    # (2 TCs on v7x; harmless serialization on v5e/v6e).
    num_cores = 2 if pl.cdiv(n, tr) >= 2 else 1
    n_pad = _round_up(n, num_cores * tr)
    tiles_per_core = n_pad // (num_cores * tr)

    dec_t = dec_tgt.reshape(n, 1).astype(jnp.int32)
    sim_t = sim_tgt.reshape(n, 1).astype(jnp.int32)
    if n_pad != n:
        pad = n_pad - n
        dec_logits = jnp.pad(dec_logits, ((0, pad), (0, 0)))
        sim_logits = jnp.pad(sim_logits, ((0, pad), (0, 0)))
        dec_t = jnp.pad(dec_t, ((0, pad), (0, 0)), constant_values=IGNORE_INDEX)
        sim_t = jnp.pad(sim_t, ((0, pad), (0, 0)), constant_values=IGNORE_INDEX)

    logits_spec = pl.BlockSpec((tr, c), lambda p, r: (p * tiles_per_core + r, 0))
    tgt_spec = pl.BlockSpec((tr, 1), lambda p, r: (p * tiles_per_core + r, 0))

    # TODO(synk): for small C a wrapper reshape packing 128//C rows per lane
    # row would lift VPU/EUP utilization; HBM-bound here, so left out.
    partials = pl.pallas_call(
        _multitask_ce_kernel,
        out_shape=jax.ShapeDtypeStruct((num_cores, 2, 2), jnp.float32),
        grid=(num_cores, tiles_per_core),
        in_specs=[
            logits_spec,   # decoder logits (native dtype, no wrapper cast)
            tgt_spec,      # decoder targets
            logits_spec,   # sim-threshold logits
            tgt_spec,      # sim-threshold targets
        ],
        out_specs=pl.BlockSpec((1, 2, 2), lambda p, r: (p, 0, 0)),
        scratch_shapes=[pltpu.VMEM((2, 2), jnp.float32)],  # [task, {sum, cnt}]
        compiler_params=pltpu.CompilerParams(
            dimension_semantics=("parallel", "arbitrary"),
            vmem_limit_bytes=vmem_limit,
        ),
    )(dec_logits, dec_t, sim_logits, sim_t)

    # Trivial combine on ~8 scalars in plain JAX (per perf review).
    sums = jnp.sum(partials[:, :, 0], axis=0)   # (2,)
    cnts = jnp.sum(partials[:, :, 1], axis=0)   # (2,)
    # NaN if a task has zero valid targets — matches torch CE mean reduction.
    task_ce = sums / cnts

    lv = log_vars.reshape(2).astype(jnp.float32)
    me = mml_emp.reshape(2).astype(jnp.float32)
    # stds = sqrt(exp(lv)); weights = 1/((me+1)*stds^2); + log(stds)
    # simplified (overflow-safe): weights = exp(-lv)/(me+1); log(stds) = lv/2.
    weights = jnp.exp(-lv) / (me + 1.0)
    losses = weights * task_ce + 0.5 * lv

    return {DECODER: losses[0],
            SIMILARITY_THRESHOLD: losses[1],
            MULTITASK: jnp.mean(losses)}


def multi_task_loss(output, target, log_vars, mml_emp, task=MULTITASK):
    # TODO(synk): `args.task` selection in the original module is runtime
    # config; exposed here via the `task` argument.
    return multi_task_loss_all(output, target, log_vars, mml_emp)[task]


if __name__ == "__main__":
    key = jax.random.PRNGKey(0)
    k1, k2, k3, k4 = jax.random.split(key, 4)

    N, C = 10, 32  # N not a multiple of 8 -> exercises the padding path

    dec_logits = jax.random.normal(k1, (N, C), dtype=jnp.float32)
    sim_logits = jax.random.normal(k2, (N, C), dtype=jnp.float32)
    dec_targets = jax.random.randint(k3, (N,), 0, C, dtype=jnp.int32)
    sim_targets = jax.random.randint(k4, (N,), 0, C, dtype=jnp.int32)
    # mark a couple of targets as ignored
    dec_targets = dec_targets.at[0].set(IGNORE_INDEX)
    sim_targets = sim_targets.at[3].set(IGNORE_INDEX)

    output = {DECODER: dec_logits, SIMILARITY_THRESHOLD: sim_logits}
    target = {DECODER: dec_targets, SIMILARITY_THRESHOLD: sim_targets}

    # log_vars is a trainable parameter (init zeros); use nonzero values here
    # to exercise the uncertainty-weighting math.  mml_emp = [True, True].
    log_vars = jnp.array([0.25, -0.5], dtype=jnp.float32)
    mml_emp = jnp.array([1.0, 1.0], dtype=jnp.float32)

    result = jax.jit(multi_task_loss_all)(output, target, log_vars, mml_emp)
    jax.block_until_ready(result)

    # pure-JAX reference check
    def ref_ce(logits, targets):
        lse = jax.nn.logsumexp(logits, axis=-1)
        tl = jnp.take_along_axis(
            logits, jnp.clip(targets, 0, C - 1)[:, None], axis=-1)[:, 0]
        nll = lse - tl
        valid = targets != IGNORE_INDEX
        return jnp.sum(jnp.where(valid, nll, 0.0)) / jnp.sum(valid)

    tl_ref = jnp.stack((ref_ce(dec_logits, dec_targets),
                        ref_ce(sim_logits, sim_targets)))
    stds = jnp.sqrt(jnp.exp(log_vars))
    weights = 1.0 / ((mml_emp + 1.0) * stds ** 2)
    ref_losses = weights * tl_ref + jnp.log(stds)
    ref = {DECODER: ref_losses[0],
           SIMILARITY_THRESHOLD: ref_losses[1],
           MULTITASK: jnp.mean(ref_losses)}

    for k in (DECODER, SIMILARITY_THRESHOLD, MULTITASK):
        assert jnp.allclose(result[k], ref[k], rtol=1e-5, atol=1e-5), (
            k, result[k], ref[k])

    print("KERNEL_OK")
</pallas_src>

<mosaic_0001>
module attributes {stable_mosaic.version = 11 : i64} {
  func.func @_multitask_ce_kernel(%arg0: i32, %arg1: i32, %arg2: memref<16x32xf32, #tpu.memory_space<vmem>>, %arg3: memref<16x1xi32, #tpu.memory_space<vmem>>, %arg4: memref<16x32xf32, #tpu.memory_space<vmem>>, %arg5: memref<16x1xi32, #tpu.memory_space<vmem>>, %arg6: memref<1x2x2xf32, #tpu.memory_space<vmem>>, %arg7: memref<2x2xf32, #tpu.memory_space<vmem>>) attributes {dimension_semantics = [#tpu.dimension_semantics<parallel>, #tpu.dimension_semantics<arbitrary>], iteration_bounds = array<i64: 1, 1>, scalar_prefetch = 0 : i64, scratch_operands = 1 : i64, tpu.core_type = #tpu.core_type<tc>, window_params = [{transform_indices = @transform_0, window_bounds = array<i64: 16, 32>}, {transform_indices = @transform_1, window_bounds = array<i64: 16, 1>}, {transform_indices = @transform_2, window_bounds = array<i64: 16, 32>}, {transform_indices = @transform_3, window_bounds = array<i64: 16, 1>}, {transform_indices = @transform_4, window_bounds = array<i64: 1, 2, 2>}]} {
    %c0_i32 = arith.constant 0 : i32
    %0 = arith.cmpi eq, %arg1, %c0_i32 : i32
    %1 = arith.extui %0 : i1 to i32
    %c0_i32_0 = arith.constant 0 : i32
    %2 = arith.cmpi ne, %1, %c0_i32_0 : i32
    scf.if %2 {
      %cst_37 = arith.constant 0.000000e+00 : f32
      %106 = vector.broadcast %cst_37 : f32 to vector<2x2xf32>
      %c0_38 = arith.constant 0 : index
      %c0_39 = arith.constant 0 : index
      %107 = vector.load %arg7[%c0_38, %c0_39] : memref<2x2xf32, #tpu.memory_space<vmem>>, vector<2x2xf32>
      tpu.vector_store %arg7[%c0_38, %c0_39], %106 {strides = array<i32>} : memref<2x2xf32, #tpu.memory_space<vmem>>, vector<2x2xf32>,
    } else {
    }
    %3 = tpu.iota {dimensions = array<i32: 0>} : vector<2x2xi32>
    %4 = tpu.iota {dimensions = array<i32: 1>} : vector<2x2xi32>
    %c0 = arith.constant 0 : index
    %c0_1 = arith.constant 0 : index
    %5 = vector.load %arg2[%c0, %c0_1] : memref<16x32xf32, #tpu.memory_space<vmem>>, vector<16x32xf32>
    %c0_2 = arith.constant 0 : index
    %c0_3 = arith.constant 0 : index
    %6 = vector.load %arg3[%c0_2, %c0_3] : memref<16x1xi32, #tpu.memory_space<vmem>>, vector<16x1xi32>
    %cst = arith.constant dense<0xFF800000> : vector<16xf32>
    %7 = vector.multi_reduction <maximumf>, %5, %cst [1] : vector<16x32xf32> to vector<16xf32>
    %8 = vector.shape_cast %7 : vector<16xf32> to vector<16x1xf32>
    %9 = vector.broadcast %8 : vector<16x1xf32> to vector<16x32xf32>
    %10 = arith.subf %5, %9 : vector<16x32xf32>
    %11 = math.exp %10 : vector<16x32xf32>
    %cst_4 = arith.constant dense<0.000000e+00> : vector<16xf32>
    %12 = vector.multi_reduction <add>, %11, %cst_4 [1] : vector<16x32xf32> to vector<16xf32>
    %13 = vector.shape_cast %12 : vector<16xf32> to vector<16x1xf32>
    %14 = math.log %13 : vector<16x1xf32>
    %15 = arith.addf %14, %8 : vector<16x1xf32>
    %16 = tpu.iota {dimensions = array<i32: 1>} : vector<16x32xi32>
    %17 = vector.broadcast %6 : vector<16x1xi32> to vector<16x32xi32>
    %18 = arith.cmpi eq, %16, %17 : vector<16x32xi32>
    %cst_5 = arith.constant 0.000000e+00 : f32
    %19 = vector.broadcast %cst_5 : f32 to vector<16x32xf32>
    %20 = arith.select %18, %5, %19 : vector<16x32xi1>, vector<16x32xf32>
    %cst_6 = arith.constant dense<0.000000e+00> : vector<16xf32>
    %21 = vector.multi_reduction <add>, %20, %cst_6 [1] : vector<16x32xf32> to vector<16xf32>
    %22 = vector.shape_cast %21 : vector<16xf32> to vector<16x1xf32>
    %23 = arith.subf %15, %22 : vector<16x1xf32>
    %c-100_i32 = arith.constant -100 : i32
    %24 = vector.broadcast %c-100_i32 : i32 to vector<16x1xi32>
    %25 = arith.cmpi ne, %6, %24 : vector<16x1xi32>
    %cst_7 = arith.constant 0.000000e+00 : f32
    %26 = vector.broadcast %cst_7 : f32 to vector<16x1xf32>
    %27 = arith.select %25, %23, %26 : vector<16x1xi1>, vector<16x1xf32>
    %28 = vector.shape_cast %27 : vector<16x1xf32> to vector<1x16x1xf32>
    %cst_8 = arith.constant dense<0.000000e+00> : vector<1xf32>
    %29 = vector.multi_reduction <add>, %28, %cst_8 [1, 2] : vector<1x16x1xf32> to vector<1xf32>
    %30 = vector.shape_cast %29 : vector<1xf32> to vector<1x1x1xf32>
    %31 = vector.extract %30[0, 0, 0] : f32 from vector<1x1x1xf32>
    %32 = vector.broadcast %31 : f32 to vector<1x1xf32>
    %33 = arith.extui %25 : vector<16x1xi1> to vector<16x1xi32>
    %34 = arith.sitofp %33 : vector<16x1xi32> to vector<16x1xf32>
    %35 = vector.shape_cast %34 : vector<16x1xf32> to vector<1x16x1xf32>
    %cst_9 = arith.constant dense<0.000000e+00> : vector<1xf32>
    %36 = vector.multi_reduction <add>, %35, %cst_9 [1, 2] : vector<1x16x1xf32> to vector<1xf32>
    %37 = vector.shape_cast %36 : vector<1xf32> to vector<1x1x1xf32>
    %38 = vector.extract %37[0, 0, 0] : f32 from vector<1x1x1xf32>
    %39 = vector.broadcast %38 : f32 to vector<1x1xf32>
    %c0_i32_10 = arith.constant 0 : i32
    %40 = vector.broadcast %c0_i32_10 : i32 to vector<2x2xi32>
    %41 = arith.cmpi eq, %4, %40 : vector<2x2xi32>
    %42 = vector.shape_cast %32 : vector<1x1xf32> to vector<1x1xf32>
    %43 = vector.broadcast %42 : vector<1x1xf32> to vector<2x2xf32>
    %44 = vector.shape_cast %39 : vector<1x1xf32> to vector<1x1xf32>
    %45 = vector.broadcast %44 : vector<1x1xf32> to vector<2x2xf32>
    %46 = arith.select %41, %43, %45 : vector<2x2xi1>, vector<2x2xf32>
    %c0_i32_11 = arith.constant 0 : i32
    %47 = vector.broadcast %c0_i32_11 : i32 to vector<2x2xi32>
    %48 = arith.cmpi eq, %3, %47 : vector<2x2xi32>
    %cst_12 = arith.constant 0.000000e+00 : f32
    %49 = vector.broadcast %cst_12 : f32 to vector<2x2xf32>
    %50 = arith.select %48, %46, %49 : vector<2x2xi1>, vector<2x2xf32>
    %c0_13 = arith.constant 0 : index
    %c0_14 = arith.constant 0 : index
    %51 = vector.load %arg7[%c0_13, %c0_14] : memref<2x2xf32, #tpu.memory_space<vmem>>, vector<2x2xf32>
    %52 = arith.addf %51, %50 : vector<2x2xf32>
    %c0_15 = arith.constant 0 : index
    %c0_16 = arith.constant 0 : index
    %53 = vector.load %arg7[%c0_15, %c0_16] : memref<2x2xf32, #tpu.memory_space<vmem>>, vector<2x2xf32>
    tpu.vector_store %arg7[%c0_15, %c0_16], %52 {strides = array<i32>} : memref<2x2xf32, #tpu.memory_space<vmem>>, vector<2x2xf32>,
    %c0_17 = arith.constant 0 : index
    %c0_18 = arith.constant 0 : index
    %54 = vector.load %arg4[%c0_17, %c0_18] : memref<16x32xf32, #tpu.memory_space<vmem>>, vector<16x32xf32>
    %c0_19 = arith.constant 0 : index
    %c0_20 = arith.constant 0 : index
    %55 = vector.load %arg5[%c0_19, %c0_20] : memref<16x1xi32, #tpu.memory_space<vmem>>, vector<16x1xi32>
    %cst_21 = arith.constant dense<0xFF800000> : vector<16xf32>
    %56 = vector.multi_reduction <maximumf>, %54, %cst_21 [1] : vector<16x32xf32> to vector<16xf32>
    %57 = vector.shape_cast %56 : vector<16xf32> to vector<16x1xf32>
    %58 = vector.broadcast %57 : vector<16x1xf32> to vector<16x32xf32>
    %59 = arith.subf %54, %58 : vector<16x32xf32>
    %60 = math.exp %59 : vector<16x32xf32>
    %cst_22 = arith.constant dense<0.000000e+00> : vector<16xf32>
    %61 = vector.multi_reduction <add>, %60, %cst_22 [1] : vector<16x32xf32> to vector<16xf32>
    %62 = vector.shape_cast %61 : vector<16xf32> to vector<16x1xf32>
    %63 = math.log %62 : vector<16x1xf32>
    %64 = arith.addf %63, %57 : vector<16x1xf32>
    %65 = tpu.iota {dimensions = array<i32: 1>} : vector<16x32xi32>
    %66 = vector.broadcast %55 : vector<16x1xi32> to vector<16x32xi32>
    %67 = arith.cmpi eq, %65, %66 : vector<16x32xi32>
    %cst_23 = arith.constant 0.000000e+00 : f32
    %68 = vector.broadcast %cst_23 : f32 to vector<16x32xf32>
    %69 = arith.select %67, %54, %68 : vector<16x32xi1>, vector<16x32xf32>
    %cst_24 = arith.constant dense<0.000000e+00> : vector<16xf32>
    %70 = vector.multi_reduction <add>, %69, %cst_24 [1] : vector<16x32xf32> to vector<16xf32>
    %71 = vector.shape_cast %70 : vector<16xf32> to vector<16x1xf32>
    %72 = arith.subf %64, %71 : vector<16x1xf32>
    %c-100_i32_25 = arith.constant -100 : i32
    %73 = vector.broadcast %c-100_i32_25 : i32 to vector<16x1xi32>
    %74 = arith.cmpi ne, %55, %73 : vector<16x1xi32>
    %cst_26 = arith.constant 0.000000e+00 : f32
    %75 = vector.broadcast %cst_26 : f32 to vector<16x1xf32>
    %76 = arith.select %74, %72, %75 : vector<16x1xi1>, vector<16x1xf32>
    %77 = vector.shape_cast %76 : vector<16x1xf32> to vector<1x16x1xf32>
    %cst_27 = arith.constant dense<0.000000e+00> : vector<1xf32>
    %78 = vector.multi_reduction <add>, %77, %cst_27 [1, 2] : vector<1x16x1xf32> to vector<1xf32>
    %79 = vector.shape_cast %78 : vector<1xf32> to vector<1x1x1xf32>
    %80 = vector.extract %79[0, 0, 0] : f32 from vector<1x1x1xf32>
    %81 = vector.broadcast %80 : f32 to vector<1x1xf32>
    %82 = arith.extui %74 : vector<16x1xi1> to vector<16x1xi32>
    %83 = arith.sitofp %82 : vector<16x1xi32> to vector<16x1xf32>
    %84 = vector.shape_cast %83 : vector<16x1xf32> to vector<1x16x1xf32>
    %cst_28 = arith.constant dense<0.000000e+00> : vector<1xf32>
    %85 = vector.multi_reduction <add>, %84, %cst_28 [1, 2] : vector<1x16x1xf32> to vector<1xf32>
    %86 = vector.shape_cast %85 : vector<1xf32> to vector<1x1x1xf32>
    %87 = vector.extract %86[0, 0, 0] : f32 from vector<1x1x1xf32>
    %88 = vector.broadcast %87 : f32 to vector<1x1xf32>
    %c0_i32_29 = arith.constant 0 : i32
    %89 = vector.broadcast %c0_i32_29 : i32 to vector<2x2xi32>
    %90 = arith.cmpi eq, %4, %89 : vector<2x2xi32>
    %91 = vector.shape_cast %81 : vector<1x1xf32> to vector<1x1xf32>
    %92 = vector.broadcast %91 : vector<1x1xf32> to vector<2x2xf32>
    %93 = vector.shape_cast %88 : vector<1x1xf32> to vector<1x1xf32>
    %94 = vector.broadcast %93 : vector<1x1xf32> to vector<2x2xf32>
    %95 = arith.select %90, %92, %94 : vector<2x2xi1>, vector<2x2xf32>
    %c1_i32 = arith.constant 1 : i32
    %96 = vector.broadcast %c1_i32 : i32 to vector<2x2xi32>
    %97 = arith.cmpi eq, %3, %96 : vector<2x2xi32>
    %cst_30 = arith.constant 0.000000e+00 : f32
    %98 = vector.broadcast %cst_30 : f32 to vector<2x2xf32>
    %99 = arith.select %97, %95, %98 : vector<2x2xi1>, vector<2x2xf32>
    %c0_31 = arith.constant 0 : index
    %c0_32 = arith.constant 0 : index
    %100 = vector.load %arg7[%c0_31, %c0_32] : memref<2x2xf32, #tpu.memory_space<vmem>>, vector<2x2xf32>
    %101 = arith.addf %100, %99 : vector<2x2xf32>
    %c0_33 = arith.constant 0 : index
    %c0_34 = arith.constant 0 : index
    %102 = vector.load %arg7[%c0_33, %c0_34] : memref<2x2xf32, #tpu.memory_space<vmem>>, vector<2x2xf32>
    tpu.vector_store %arg7[%c0_33, %c0_34], %101 {strides = array<i32>} : memref<2x2xf32, #tpu.memory_space<vmem>>, vector<2x2xf32>,
    %c0_i32_35 = arith.constant 0 : i32
    %103 = arith.cmpi eq, %arg1, %c0_i32_35 : i32
    %104 = arith.extui %103 : i1 to i32
    %c0_i32_36 = arith.constant 0 : i32
    %105 = arith.cmpi ne, %104, %c0_i32_36 : i32
    scf.if %105 {
      %c0_37 = arith.constant 0 : index
      %c0_38 = arith.constant 0 : index
      %106 = vector.load %arg7[%c0_37, %c0_38] : memref<2x2xf32, #tpu.memory_space<vmem>>, vector<2x2xf32>
      %c0_39 = arith.constant 0 : index
      %c0_40 = arith.constant 0 : index
      %c0_41 = arith.constant 0 : index
      %107 = vector.load %arg6[%c0_39, %c0_40, %c0_41] : memref<1x2x2xf32, #tpu.memory_space<vmem>>, vector<1x2x2xf32>
      %108 = vector.shape_cast %107 : vector<1x2x2xf32> to vector<2x2xf32>
      %109 = vector.shape_cast %106 : vector<2x2xf32> to vector<1x2x2xf32>
      tpu.vector_store %arg6[%c0_39, %c0_40, %c0_41], %109 {strides = array<i32>} : memref<1x2x2xf32, #tpu.memory_space<vmem>>, vector<1x2x2xf32>,
    } else {
    }
    return
  }
  func.func @transform_0(%arg0: i32, %arg1: i32) -> (i32, i32) {
    %c1_i32 = arith.constant 1 : i32
    %0 = arith.muli %arg0, %c1_i32 : i32
    %1 = arith.addi %0, %arg1 : i32
    %c0_i32 = arith.constant 0 : i32
    %c0_i32_0 = arith.constant 0 : i32
    return %1, %c0_i32 : i32, i32
  }
  func.func @transform_1(%arg0: i32, %arg1: i32) -> (i32, i32) {
    %c1_i32 = arith.constant 1 : i32
    %0 = arith.muli %arg0, %c1_i32 : i32
    %1 = arith.addi %0, %arg1 : i32
    %c0_i32 = arith.constant 0 : i32
    %c0_i32_0 = arith.constant 0 : i32
    return %1, %c0_i32 : i32, i32
  }
  func.func @transform_2(%arg0: i32, %arg1: i32) -> (i32, i32) {
    %c1_i32 = arith.constant 1 : i32
    %0 = arith.muli %arg0, %c1_i32 : i32
    %1 = arith.addi %0, %arg1 : i32
    %c0_i32 = arith.constant 0 : i32
    %c0_i32_0 = arith.constant 0 : i32
    return %1, %c0_i32 : i32, i32
  }
  func.func @transform_3(%arg0: i32, %arg1: i32) -> (i32, i32) {
    %c1_i32 = arith.constant 1 : i32
    %0 = arith.muli %arg0, %c1_i32 : i32
    %1 = arith.addi %0, %arg1 : i32
    %c0_i32 = arith.constant 0 : i32
    %c0_i32_0 = arith.constant 0 : i32
    return %1, %c0_i32 : i32, i32
  }
  func.func @transform_4(%arg0: i32, %arg1: i32) -> (i32, i32, i32) {
    %c0_i32 = arith.constant 0 : i32
    %c0_i32_0 = arith.constant 0 : i32
    %c0_i32_1 = arith.constant 0 : i32
    return %arg0, %c0_i32, %c0_i32_0 : i32, i32, i32
  }
}

</mosaic_0001>

<llo_original>
// kernel: multi_task_loss_all.1
$region0: #{multi_task_loss_all.1}
  #allocation0 [shape = 'u32[]', space=smem, size = 0x4, offset = 0x4, fixed_abs, tag = 'smem constant byte address 0x4 - core index']
  #allocation1 [shape = 'u32[144,128]{1,0:T(1,128)}', space=vmem, size = 0x12000, scoped, tag = 'internal scratch']
  #allocation2 [shape = 'f32[2,2]{1,0:T(2,128)}', space=vmem, size = 0x400, scoped, tag = 'scratch operand']
  %s0 = inlined_call_operand.vmem [shape: f32[16,32], index: 0, kind: input, shape index: {}]
  %s1 = inlined_call_operand.vmem [shape: s32[16,1], index: 1, kind: input, shape index: {}]
  %s2 = inlined_call_operand.vmem [shape: f32[16,32], index: 2, kind: input, shape index: {}]
  %s3 = inlined_call_operand.vmem [shape: s32[16,1], index: 3, kind: input, shape index: {}]
  %s4 = inlined_call_operand.vmem [shape: f32[1,2,2], index: 4, kind: output, shape index: {}]
  %s5 = sld [smem:[#allocation0]]
  $region34: #{multi_task_loss_all.1} parent=0
    _
  %s7 = ssub.s32 1, %s5
  %s8 = scalar_select 0, %s7, %s5
  // Predicated region
  $region2: #{multi_task_loss_all.1} parent=0 // pred_check
    _
  $region3: #{multi_task_loss_all.1} parent=0 // pred_check_branch
    %10 = sbr.rel (0) target = $region5
  $region4: #{multi_task_loss_all.1} parent=0 // pred_region
    %s11 = sadd.s32 0, 0
    %s12 = smul.u32 2, %s11
    %p13 = scmp.lt.s32.totalorder %s12, 1
    %s14 = scalar_select %p13, %s12, 1
    %s15 = smul.addr %s14, 8
    %s16 = scalar_lea.vmem %s0, %s15
    %s17 = sadd.s32 0, 0
    %s18 = smul.u32 2, %s17
  $region5: #{multi_task_loss_all.1} parent=0 // pred_fallthru
    _
  // Predicated region
  $region6: #{multi_task_loss_all.1} parent=0 // pred_check
    _
  $region7: #{multi_task_loss_all.1} parent=0 // pred_check_branch
    %20 = sbr.rel (0) target = $region9
  $region8: #{multi_task_loss_all.1} parent=0 // pred_region
    %s21 = sadd.s32 0, 0
    %s22 = smul.u32 2, %s21
    %p23 = scmp.lt.s32.totalorder %s22, 1
    %s24 = scalar_select %p23, %s22, 1
    %s25 = smul.addr %s24, 8
    %s26 = scalar_lea.vmem %s1, %s25
    %s27 = sadd.s32 0, 0
    %s28 = smul.u32 2, %s27
  $region9: #{multi_task_loss_all.1} parent=0 // pred_fallthru
    _
  // Predicated region
  $region10: #{multi_task_loss_all.1} parent=0 // pred_check
    _
  $region11: #{multi_task_loss_all.1} parent=0 // pred_check_branch
    %30 = sbr.rel (0) target = $region13
  $region12: #{multi_task_loss_all.1} parent=0 // pred_region
    %s31 = sadd.s32 0, 0
    %s32 = smul.u32 2, %s31
    %p33 = scmp.lt.s32.totalorder %s32, 1
    %s34 = scalar_select %p33, %s32, 1
    %s35 = smul.addr %s34, 8
    %s36 = scalar_lea.vmem %s2, %s35
    %s37 = sadd.s32 0, 0
    %s38 = smul.u32 2, %s37
  $region13: #{multi_task_loss_all.1} parent=0 // pred_fallthru
    _
  // Predicated region
  $region14: #{multi_task_loss_all.1} parent=0 // pred_check
    _
  $region15: #{multi_task_loss_all.1} parent=0 // pred_check_branch
    %40 = sbr.rel (0) target = $region17
  $region16: #{multi_task_loss_all.1} parent=0 // pred_region
    %s41 = sadd.s32 0, 0
    %s42 = smul.u32 2, %s41
    %p43 = scmp.lt.s32.totalorder %s42, 1
    %s44 = scalar_select %p43, %s42, 1
    %s45 = smul.addr %s44, 8
    %s46 = scalar_lea.vmem %s3, %s45
    %s47 = sadd.s32 0, 0
    %s48 = smul.u32 2, %s47
  $region17: #{multi_task_loss_all.1} parent=0 // pred_fallthru
    _
  %s49 = sadd.s32 0, 0
  %s50 = smul.u32 2, %s49
  %p51 = scmp.lt.s32.totalorder %s50, 1
  %s52 = scalar_select %p51, %s50, 1
  %s53 = smul.addr %s52, 8
  %s54 = scalar_lea.vmem %s0, %s53
  %s55 = sadd.s32 0, 0
  %s56 = smul.u32 2, %s55
  %p57 = scmp.lt.s32.totalorder %s56, 1
  %s58 = scalar_select %p57, %s56, 1
  %s59 = smul.addr %s58, 8
  %s60 = scalar_lea.vmem %s1, %s59
  %s61 = sadd.s32 0, 0
  %s62 = smul.u32 2, %s61
  %p63 = scmp.lt.s32.totalorder %s62, 1
  %s64 = scalar_select %p63, %s62, 1
  %s65 = smul.addr %s64, 8
  %s66 = scalar_lea.vmem %s2, %s65
  %s67 = sadd.s32 0, 0
  %s68 = smul.u32 2, %s67
  %p69 = scmp.lt.s32.totalorder %s68, 1
  %s70 = scalar_select %p69, %s68, 1
  %s71 = smul.addr %s70, 8
  %s72 = scalar_lea.vmem %s3, %s71
  %s73 = sadd.s32 0, 0
  %s74 = smul.u32 2, %s73
  %p75 = scmp.lt.s32.totalorder %s74, 1
  %s76 = scalar_select %p75, %s74, 1
  %s77 = smul.addr %s76, 8
  %s78 = scalar_lea.vmem %s0, %s77
  %s79 = sadd.s32 0, 0
  %s80 = smul.u32 2, %s79
  %s81 = sadd.s32 0, 0
  %s82 = smul.u32 2, %s81
  %p83 = scmp.lt.s32.totalorder %s82, 1
  %s84 = scalar_select %p83, %s82, 1
  %s85 = smul.addr %s84, 8
  %s86 = scalar_lea.vmem %s1, %s85
  %s87 = sadd.s32 0, 0
  %s88 = smul.u32 2, %s87
  %s89 = sadd.s32 0, 0
  %s90 = smul.u32 2, %s89
  %p91 = scmp.lt.s32.totalorder %s90, 1
  %s92 = scalar_select %p91, %s90, 1
  %s93 = smul.addr %s92, 8
  %s94 = scalar_lea.vmem %s2, %s93
  %s95 = sadd.s32 0, 0
  %s96 = smul.u32 2, %s95
  %s97 = sadd.s32 0, 0
  %s98 = smul.u32 2, %s97
  %p99 = scmp.lt.s32.totalorder %s98, 1
  %s100 = scalar_select %p99, %s98, 1
  %s101 = smul.addr %s100, 8
  %s102 = scalar_lea.vmem %s3, %s101
  %s103 = sadd.s32 0, 0
  %s104 = smul.u32 2, %s103
  %p105 = scmp.eq.s32.totalorder 0, 0
  // Predicated region
  $region18: #{multi_task_loss_all.1} parent=0 // pred_check
    %p106 = pneg %p105
  $region19: #{multi_task_loss_all.1} parent=0 // pred_check_branch
    %108 = sbr.rel (%p106) target = $region21
  $region20: #{multi_task_loss_all.1} parent=0 // pred_region
    %vm109 = vcmask 9216
    %110 = vst.msk [vmem:[#allocation2] sm:$0x3] %vm109, 0.0
  $region21: #{multi_task_loss_all.1} parent=0 // pred_fallthru
    _
  %v111 = vlaneseq
  %v112 = vshrl.u32 %v111, 7
  %v113 = vlaneseq
  %v114 = vand.u32 %v113, 127
  %v115 = vld [vmem:[%s78] sm:$0xff]
  %v116 = vld [vmem:[%s78 + $0x8] sm:$0xff]
  %v117 = vld [vmem:[%s86] sm:$0xff]
  %v118 = vld [vmem:[%s86 + $0x8] sm:$0xff]
  %vm119 = vcmask 261120
  %v120 = vsel %vm119, %v115, -inf
  %121 = vmax.xlane.f32.xlu0 %v120
  %v122 = vpop.xlane.xlu0 %121
  %v123 = vsel %vm119, %v116, -inf
  %124 = vmax.xlane.f32.xlu0 %v123
  %v125 = vpop.xlane.xlu0 %124
  %v126 = vsub.f32 %v115, %v122
  %v127 = vsub.f32 %v116, %v125
  %v128 = vmul.f32 %v126, 1.442695
  %v129 = vpow.pop %v128
  %v130 = vmul.f32 %v127, 1.442695
  %v131 = vpow.pop %v130
  %v132 = vsel %vm119, %v129, 0.0
  %133 = vadd.xlane.f32.xlu0 %v132
  %v134 = vpop.xlane.xlu0 %133
  %v135 = vsel %vm119, %v131, 0.0
  %136 = vadd.xlane.f32.xlu0 %v135
  %v137 = vpop.xlane.xlu0 %136
  %v138 = vlog2.pop %v134
  %v139 = vmul.f32 %v138, 0.6931472
  %v140 = vlog2.pop %v137
  %v141 = vmul.f32 %v140, 0.6931472
  %v142 = vadd.f32 %v139, %v122
  %v143 = vadd.f32 %v141, %v125
  %144 = vset.pattern.permute.xlu0 0
  %145 = vperm.xlu0 %144, %v117
  %v146 = vpop.permute.xlu0 %145
  %147 = vset.pattern.permute.xlu0 0
  %148 = vperm.xlu0 %147, %v118
  %v149 = vpop.permute.xlu0 %148
  %vm150 = vcmp.eq.s32.totalorder %v114, %v146
  %vm151 = vcmp.eq.s32.totalorder %v114, %v149
  %v152 = vsel %vm150, %v115, 0.0
  %v153 = vsel %vm151, %v116, 0.0
  %v154 = vsel %vm119, %v152, 0.0
  %155 = vadd.xlane.f32.xlu0 %v154
  %v156 = vpop.xlane.xlu0 %155
  %v157 = vsel %vm119, %v153, 0.0
  %158 = vadd.xlane.f32.xlu0 %v157
  %v159 = vpop.xlane.xlu0 %158
  %v160 = vsub.f32 %v142, %v156
  %v161 = vsub.f32 %v143, %v159
  %vm162 = vcmp.ne.s32.totalorder %v117, 4294967196
  %vm163 = vcmp.ne.s32.totalorder %v118, 4294967196
  %v164 = vsel %vm162, %v160, 0.0
  %v165 = vsel %vm163, %v161, 0.0
  %vm166 = vcmask 7168
  %v167 = vsel %vm166, %v164, 0.0
  %v168 = vsel %vm166, %v165, 0.0
  %v169 = vadd.f32 %v167, %v168
  %170 = vadd.xlane.f32.xlu0 %v169
  %v171 = vpop.xlane.xlu0 %170
  %v172 = vrot.slane %v171, 4
  %v173 = vadd.f32 %v171, %v172
  %v174 = vrot.slane %v173, 2
  %v175 = vadd.f32 %v173, %v174
  %v176 = vrot.slane %v175, 1
  %v177 = vadd.f32 %v175, %v176
  %s178 = vtos %v177
  %v179 = vsel %vm162, 1, 0
  %v180 = vsel %vm163, 1, 0
  %v181 = vcvt.s32.f32 %v179
  %v182 = vcvt.s32.f32 %v180
  %v183 = vsel %vm166, %v181, 0.0
  %v184 = vsel %vm166, %v182, 0.0
  %v185 = vadd.f32 %v183, %v184
  %186 = vadd.xlane.f32.xlu0 %v185
  %v187 = vpop.xlane.xlu0 %186
  %v188 = vrot.slane %v187, 4
  %v189 = vadd.f32 %v187, %v188
  %v190 = vrot.slane %v189, 2
  %v191 = vadd.f32 %v189, %v190
  %v192 = vrot.slane %v191, 1
  %v193 = vadd.f32 %v191, %v192
  %s194 = vtos %v193
  %vm195 = vcmp.eq.s32.totalorder %v114, 0
  %v196 = vstv %s178
  %v197 = vstv %s194
  %v198 = vsel %vm195, %v196, %v197
  %vm199 = vcmp.eq.s32.totalorder %v112, 0
  %v200 = vsel %vm199, %v198, 0.0
  %v201 = vld [vmem:[#allocation2] sm:$0x3]
  %v202 = vadd.f32 %v201, %v200
  %vm203 = vcmask 9216
  %204 = vst.msk [vmem:[#allocation2] sm:$0x3] %vm203, %v202
  %v205 = vld [vmem:[%s94] sm:$0xff]
  %v206 = vld [vmem:[%s94 + $0x8] sm:$0xff]
  %v207 = vld [vmem:[%s102] sm:$0xff]
  %v208 = vld [vmem:[%s102 + $0x8] sm:$0xff]
  %v209 = vsel %vm119, %v205, -inf
  %210 = vmax.xlane.f32.xlu0 %v209
  %v211 = vpop.xlane.xlu0 %210
  %v212 = vsel %vm119, %v206, -inf
  %213 = vmax.xlane.f32.xlu0 %v212
  %v214 = vpop.xlane.xlu0 %213
  %v215 = vsub.f32 %v205, %v211
  %v216 = vsub.f32 %v206, %v214
  %v217 = vmul.f32 %v215, 1.442695
  %v218 = vpow.pop %v217
  %v219 = vmul.f32 %v216, 1.442695
  %v220 = vpow.pop %v219
  %v221 = vsel %vm119, %v218, 0.0
  %222 = vadd.xlane.f32.xlu0 %v221
  %v223 = vpop.xlane.xlu0 %222
  %v224 = vsel %vm119, %v220, 0.0
  %225 = vadd.xlane.f32.xlu0 %v224
  %v226 = vpop.xlane.xlu0 %225
  %v227 = vlog2.pop %v223
  %v228 = vmul.f32 %v227, 0.6931472
  %v229 = vlog2.pop %v226
  %v230 = vmul.f32 %v229, 0.6931472
  %v231 = vadd.f32 %v228, %v211
  %v232 = vadd.f32 %v230, %v214
  %233 = vset.pattern.permute.xlu0 0
  %234 = vperm.xlu0 %233, %v207
  %v235 = vpop.permute.xlu0 %234
  %236 = vset.pattern.permute.xlu0 0
  %237 = vperm.xlu0 %236, %v208
  %v238 = vpop.permute.xlu0 %237
  %vm239 = vcmp.eq.s32.totalorder %v114, %v235
  %vm240 = vcmp.eq.s32.totalorder %v114, %v238
  %v241 = vsel %vm239, %v205, 0.0
  %v242 = vsel %vm240, %v206, 0.0
  %v243 = vsel %vm119, %v241, 0.0
  %244 = vadd.xlane.f32.xlu0 %v243
  %v245 = vpop.xlane.xlu0 %244
  %v246 = vsel %vm119, %v242, 0.0
  %247 = vadd.xlane.f32.xlu0 %v246
  %v248 = vpop.xlane.xlu0 %247
  %v249 = vsub.f32 %v231, %v245
  %v250 = vsub.f32 %v232, %v248
  %vm251 = vcmp.ne.s32.totalorder %v207, 4294967196
  %vm252 = vcmp.ne.s32.totalorder %v208, 4294967196
  %v253 = vsel %vm251, %v249, 0.0
  %v254 = vsel %vm252, %v250, 0.0
  %v255 = vsel %vm166, %v253, 0.0
  %v256 = vsel %vm166, %v254, 0.0
  %v257 = vadd.f32 %v255, %v256
  %258 = vadd.xlane.f32.xlu0 %v257
  %v259 = vpop.xlane.xlu0 %258
  %v260 = vrot.slane %v259, 4
  %v261 = vadd.f32 %v259, %v260
  %v262 = vrot.slane %v261, 2
  %v263 = vadd.f32 %v261, %v262
  %v264 = vrot.slane %v263, 1
  %v265 = vadd.f32 %v263, %v264
  %s266 = vtos %v265
  %v267 = vsel %vm251, 1, 0
  %v268 = vsel %vm252, 1, 0
  %v269 = vcvt.s32.f32 %v267
  %v270 = vcvt.s32.f32 %v268
  %v271 = vsel %vm166, %v269, 0.0
  %v272 = vsel %vm166, %v270, 0.0
  %v273 = vadd.f32 %v271, %v272
  %274 = vadd.xlane.f32.xlu0 %v273
  %v275 = vpop.xlane.xlu0 %274
  %v276 = vrot.slane %v275, 4
  %v277 = vadd.f32 %v275, %v276
  %v278 = vrot.slane %v277, 2
  %v279 = vadd.f32 %v277, %v278
  %v280 = vrot.slane %v279, 1
  %v281 = vadd.f32 %v279, %v280
  %s282 = vtos %v281
  %v283 = vstv %s266
  %v284 = vstv %s282
  %v285 = vsel %vm195, %v283, %v284
  %vm286 = vcmp.eq.s32.totalorder %v112, 1
  %v287 = vsel %vm286, %v285, 0.0
  %v288 = vld [vmem:[#allocation2] sm:$0x3]
  %v289 = vadd.f32 %v288, %v287
  %290 = vst.msk [vmem:[#allocation2] sm:$0x3] %vm203, %v289
  // Predicated region
  $region22: #{multi_task_loss_all.1} parent=0 // pred_check
    %p291 = pneg %p105
  $region23: #{multi_task_loss_all.1} parent=0 // pred_check_branch
    %293 = sbr.rel (%p291) target = $region25
  $region24: #{multi_task_loss_all.1} parent=0 // pred_region
    %v294 = vld [vmem:[#allocation2] sm:$0x3]
    %295 = vst.msk [vmem:[%s4] sm:$0x3] %vm203, %v294
  $region25: #{multi_task_loss_all.1} parent=0 // pred_fallthru
    _
  // Predicated region
  $region26: #{multi_task_loss_all.1} parent=0 // pred_check
    _
  $region27: #{multi_task_loss_all.1} parent=0 // pred_check_branch
    %297 = sbr.rel (0) target = $region29
  $region28: #{multi_task_loss_all.1} parent=0 // pred_region
    _
  $region29: #{multi_task_loss_all.1} parent=0 // pred_fallthru
    _
  // Predicated region
  $region30: #{multi_task_loss_all.1} parent=0 // pred_check
    _
  $region31: #{multi_task_loss_all.1} parent=0 // pred_check_branch
    %299 = sbr.rel (0) target = $region33
  $region32: #{multi_task_loss_all.1} parent=0 // pred_region
    _
  $region33: #{multi_task_loss_all.1} parent=0 // pred_fallthru
    _

</llo_original>
